<compile_context>
chip_gen: v7x
topology: tpu7x:2x2x1
jax: 0.10.0
libtpu: 0.0.40
codegen_flags: <defaults>
</compile_context>

<pallas_src>
import jax
import jax.numpy as jnp
from jax.experimental import pallas as pl
from jax.experimental.pallas import tpu as pltpu

BN_EPS = 1e-5


# ----------------------------------------------------------------------------
# Backbone up to the hooked layer (layer = -2):
#   hidden = flatten(avgpool(relu(conv1x1(x))))  ->  (B, C2)
# Lane-dense: HW on the lane axis; the K=C contraction unrolled on the VPU
# with the weight as (C, C2, 1) sublane columns and the bias folded into the
# first FMA.
# ----------------------------------------------------------------------------
def _backbone_hidden(x_ref, wct_ref, bc_ref):
    # x_ref:   (B, C, HW)   channels-major, HW on the lane axis
    # wct_ref: (C, C2, 1)   1x1-conv weight, contraction-major sublane columns
    # bc_ref:  (C2, 1)      conv bias as a sublane column
    x = x_ref[...]
    _, C, _ = x.shape
    # y[b, c2, hw] = bc[c2] + sum_c wct[c, c2] * x[b, c, hw]
    # Bias is folded into the first iteration (no separate bias pass).
    y = bc_ref[...][None, :, :] + x[:, 0:1, :] * wct_ref[0][None, :, :]
    for c in range(1, C):
        y = y + x[:, c:c + 1, :] * wct_ref[c][None, :, :]
    y = jnp.maximum(y, 0.0)                    # ReLU
    return jnp.mean(y, axis=2)                 # global avg pool over HW -> (B, C2)
    # NOTE: PyTorch also runs the rest of `net` (final fc) and discards its
    # output (`_ = self.net(x)`); that dead compute is intentionally skipped.
    # TODO(synk): tail-of-backbone training-time side effects (BN running
    # stats, dropout RNG advance) from that discarded call are not replicated.


# ----------------------------------------------------------------------------
# Fused kernel: backbone-to-hook + projector MLP, two outputs (hidden, proj).
#   Linear -> BatchNorm1d (training-mode batch stats) -> ReLU -> Linear
# Projector is done entirely on VPU/XLU (no MXU): per-batch broadcast-multiply
# plus one reduction per layer, alternating lane-reduce / sublane-reduce so no
# transposes or activation lane-extracts are needed.
# ----------------------------------------------------------------------------
def _fused_kernel(x_ref, wct_ref, bc_ref, w1t_ref, b1_ref, g_ref, beta_ref,
                  w2_ref, b2_ref, hid_ref, out_ref):
    pooled = _backbone_hidden(x_ref, wct_ref, bc_ref)        # (B, C2) f32
    hid_ref[...] = pooled
    B = pooled.shape[0]

    w1t = w1t_ref[...]                                       # (Hid, C2)
    b1 = b1_ref[...]                                         # (Hid, 1)
    # Layer 1: per batch row, (Hid, C2) * (1, C2) -> lane-reduce -> (Hid, 1).
    z_cols = []
    for b in range(B):
        rep_row = pooled[b:b + 1, :]                         # (1, C2) sublane row
        z_cols.append(jnp.sum(w1t * rep_row, axis=1, keepdims=True) + b1)

    # BatchNorm1d over the batch: pure elementwise arithmetic on the B columns.
    mean = z_cols[0]
    for b in range(1, B):
        mean = mean + z_cols[b]
    mean = mean * (1.0 / B)
    var = (z_cols[0] - mean) ** 2
    for b in range(1, B):
        var = var + (z_cols[b] - mean) ** 2
    var = var * (1.0 / B)                                    # biased variance
    scale = jax.lax.rsqrt(var + BN_EPS) * g_ref[...]         # (Hid, 1)
    shift = beta_ref[...] - mean * scale                     # fold mean into affine
    # TODO(synk): PyTorch BatchNorm1d also updates running_mean/running_var as
    # a training-time side effect; only the forward value is replicated here.

    w2 = w2_ref[...]                                         # (Hid, P)
    b2 = b2_ref[...]                                         # (1, P)
    out_rows = []
    for b in range(B):
        a_col = jnp.maximum(z_cols[b] * scale + shift, 0.0)  # BN + ReLU, (Hid, 1)
        # Layer 2: (Hid, P) * (Hid, 1) -> sublane-reduce -> (1, P).
        out_rows.append(jnp.sum(w2 * a_col, axis=0, keepdims=True) + b2)
    out_ref[...] = jnp.concatenate(out_rows, axis=0)         # (B, P)


# Representation-only path (return_projection=False): projector params unused.
def _repr_kernel(x_ref, wct_ref, bc_ref, out_ref):
    out_ref[...] = _backbone_hidden(x_ref, wct_ref, bc_ref)


# ----------------------------------------------------------------------------
# NetWrapper.forward
# ----------------------------------------------------------------------------
def _fused_call(x_nchw, params):
    B, C, H, W = x_nchw.shape
    HW = H * W
    C2 = params["bc"].shape[0]
    Hid = params["w1t"].shape[0]
    P = params["w2"].shape[1]

    # Free reshape (no transpose): NCHW -> (B, C, HW), HW lands on the lane axis.
    x = x_nchw.reshape(B, C, HW)
    vmem = pl.BlockSpec(memory_space=pltpu.MemorySpace.VMEM)  # whole-array in VMEM

    backbone_flops = 2 * B * HW * C * C2 + 2 * B * C2 * HW
    proj_flops = 2 * B * C2 * Hid + 10 * B * Hid + 2 * B * Hid * P
    bytes_acc = 4 * (x.size + params["wct"].size + params["bc"].size +
                     params["w1t"].size + params["b1"].size +
                     params["gamma"].size + params["beta"].size +
                     params["w2"].size + params["b2"].size + B * C2 + B * P)

    hidden, proj = pl.pallas_call(
        _fused_kernel,
        out_shape=(jax.ShapeDtypeStruct((B, C2), jnp.float32),
                   jax.ShapeDtypeStruct((B, P), jnp.float32)),
        in_specs=[vmem] * 9,
        out_specs=(vmem, vmem),
        cost_estimate=pl.CostEstimate(
            flops=backbone_flops + proj_flops,
            transcendentals=Hid,                 # rsqrt per hidden feature
            bytes_accessed=bytes_acc),
    )(x, params["wct"], params["bc"], params["w1t"], params["b1"],
      params["gamma"], params["beta"], params["w2"], params["b2"])
    return hidden, proj


def net_wrapper_forward_both(x_nchw, params):
    """Single-launch BYOL path: (representation, projection)."""
    return _fused_call(x_nchw, params)


def net_wrapper_forward(x_nchw, params, return_projection=True):
    if not return_projection:
        B, C, H, W = x_nchw.shape
        HW = H * W
        C2 = params["bc"].shape[0]
        x = x_nchw.reshape(B, C, HW)
        vmem = pl.BlockSpec(memory_space=pltpu.MemorySpace.VMEM)
        backbone_flops = 2 * B * HW * C * C2 + 2 * B * C2 * HW
        backbone_bytes = 4 * (x.size + params["wct"].size + params["bc"].size + B * C2)
        return pl.pallas_call(
            _repr_kernel,
            out_shape=jax.ShapeDtypeStruct((B, C2), jnp.float32),
            in_specs=[vmem, vmem, vmem],
            out_specs=vmem,
            cost_estimate=pl.CostEstimate(
                flops=backbone_flops, transcendentals=0,
                bytes_accessed=backbone_bytes),
        )(x, params["wct"], params["bc"])
    _, proj = _fused_call(x_nchw, params)
    return proj


# ----------------------------------------------------------------------------
# Deterministic parameter init (PyTorch-style uniform bounds), kernel layouts.
# ----------------------------------------------------------------------------
def init_params(key, C, C2, projection_size, projection_hidden_size):
    ks = jax.random.split(key, 6)

    def uni(k, shape, fan_in):
        bound = 1.0 / float(fan_in) ** 0.5
        return jax.random.uniform(k, shape, jnp.float32, -bound, bound)

    Hid, P = projection_hidden_size, projection_size
    return dict(
        wct=uni(ks[0], (C, C2, 1), C),        # conv1x1 weight, contraction-major
        bc=uni(ks[1], (C2, 1), C),            # conv bias (sublane column)
        w1t=uni(ks[2], (Hid, C2), C2),        # Linear-1 weight, (out, in) PyTorch layout
        b1=uni(ks[3], (Hid, 1), C2),          # Linear-1 bias (column)
        gamma=jnp.ones((Hid, 1), jnp.float32),   # BN weight (column)
        beta=jnp.zeros((Hid, 1), jnp.float32),   # BN bias (column)
        w2=uni(ks[4], (Hid, P), Hid),         # Linear-2 weight, (in, out)
        b2=uni(ks[5], (1, P), Hid),           # Linear-2 bias (row)
    )


# ----------------------------------------------------------------------------
# Pure-JAX references (correctness checks)
# ----------------------------------------------------------------------------
def reference_hidden(x_nchw, p):
    B, C, H, W = x_nchw.shape
    xp = x_nchw.reshape(B, C, H * W)
    w = p["wct"][:, :, 0]                                  # (C, C2)
    y = jnp.einsum("cd,bcp->bdp", w, xp) + p["bc"][None]   # (B, C2, HW)
    y = jnp.maximum(y, 0.0)
    return jnp.mean(y, axis=2)                             # (B, C2)


def reference_forward(x_nchw, p):
    hidden = reference_hidden(x_nchw, p)
    z = hidden @ p["w1t"].T + p["b1"][:, 0][None, :]
    mean = jnp.mean(z, axis=0, keepdims=True)
    var = jnp.mean((z - mean) ** 2, axis=0, keepdims=True)
    zn = (z - mean) / jnp.sqrt(var + BN_EPS)
    zn = zn * p["gamma"][:, 0][None, :] + p["beta"][:, 0][None, :]
    a = jnp.maximum(zn, 0.0)
    return a @ p["w2"] + p["b2"]


if __name__ == "__main__":
    B, C, H, W = 2, 4, 16, 16            # input NCHW
    C2 = 8                               # backbone feature channels (hooked hidden dim)
    projection_size = 16
    projection_hidden_size = 32

    key = jax.random.PRNGKey(0)
    kx, kp = jax.random.split(key)
    x = jax.random.normal(kx, (B, C, H, W), jnp.float32)
    params = init_params(kp, C, C2, projection_size, projection_hidden_size)

    # Single fused launch returning (hidden, projection)
    hidden, proj = jax.block_until_ready(net_wrapper_forward_both(x, params))
    assert hidden.shape == (B, C2), hidden.shape
    assert proj.shape == (B, projection_size), proj.shape

    ref_h = reference_hidden(x, params)
    ref_p = reference_forward(x, params)
    assert jnp.allclose(hidden, ref_h, atol=1e-5, rtol=1e-5), (
        float(jnp.max(jnp.abs(hidden - ref_h))))
    assert jnp.allclose(proj, ref_p, atol=1e-4, rtol=1e-4), (
        float(jnp.max(jnp.abs(proj - ref_p))))

    # Module-equivalent forward paths
    proj2 = jax.block_until_ready(net_wrapper_forward(x, params, return_projection=True))
    assert jnp.allclose(proj2, ref_p, atol=1e-4, rtol=1e-4)

    rep = jax.block_until_ready(net_wrapper_forward(x, params, return_projection=False))
    assert rep.shape == (B, C2), rep.shape
    assert jnp.allclose(rep, ref_h, atol=1e-5, rtol=1e-5), (
        float(jnp.max(jnp.abs(rep - ref_h))))

    print("KERNEL_OK")
</pallas_src>

<mosaic_0001>
module attributes {stable_mosaic.version = 11 : i64} {
  func.func @_fused_kernel(%arg0: memref<2x4x256xf32, #tpu.memory_space<vmem>>, %arg1: memref<4x8x1xf32, #tpu.memory_space<vmem>>, %arg2: memref<8x1xf32, #tpu.memory_space<vmem>>, %arg3: memref<32x8xf32, #tpu.memory_space<vmem>>, %arg4: memref<32x1xf32, #tpu.memory_space<vmem>>, %arg5: memref<32x1xf32, #tpu.memory_space<vmem>>, %arg6: memref<32x1xf32, #tpu.memory_space<vmem>>, %arg7: memref<32x16xf32, #tpu.memory_space<vmem>>, %arg8: memref<1x16xf32, #tpu.memory_space<vmem>>, %arg9: memref<2x8xf32, #tpu.memory_space<vmem>>, %arg10: memref<2x16xf32, #tpu.memory_space<vmem>>) attributes {dimension_semantics = [], scalar_prefetch = 0 : i64, scratch_operands = 0 : i64, tpu.core_type = #tpu.core_type<tc>} {
    %c0 = arith.constant 0 : index
    %c0_0 = arith.constant 0 : index
    %c0_1 = arith.constant 0 : index
    %0 = vector.load %arg0[%c0, %c0_0, %c0_1] : memref<2x4x256xf32, #tpu.memory_space<vmem>>, vector<2x4x256xf32>
    %c0_2 = arith.constant 0 : index
    %c0_3 = arith.constant 0 : index
    %1 = vector.load %arg2[%c0_2, %c0_3] : memref<8x1xf32, #tpu.memory_space<vmem>>, vector<8x1xf32>
    %2 = vector.shape_cast %1 : vector<8x1xf32> to vector<1x8x1xf32>
    %3 = vector.extract_strided_slice %0 {offsets = [0, 0, 0], sizes = [2, 1, 256], strides = [1, 1, 1]} : vector<2x4x256xf32> to vector<2x1x256xf32>
    %c0_4 = arith.constant 0 : index
    %c0_5 = arith.constant 0 : index
    %c0_6 = arith.constant 0 : index
    %4 = vector.load %arg1[%c0_4, %c0_5, %c0_6] : memref<4x8x1xf32, #tpu.memory_space<vmem>>, vector<1x8x1xf32>
    %5 = vector.shape_cast %4 : vector<1x8x1xf32> to vector<8x1xf32>
    %6 = vector.shape_cast %5 : vector<8x1xf32> to vector<1x8x1xf32>
    %7 = vector.broadcast %3 : vector<2x1x256xf32> to vector<2x8x256xf32>
    %8 = vector.broadcast %6 : vector<1x8x1xf32> to vector<2x8x256xf32>
    %9 = arith.mulf %7, %8 : vector<2x8x256xf32>
    %10 = vector.broadcast %2 : vector<1x8x1xf32> to vector<2x8x256xf32>
    %11 = arith.addf %10, %9 : vector<2x8x256xf32>
    %12 = vector.extract_strided_slice %0 {offsets = [0, 1, 0], sizes = [2, 1, 256], strides = [1, 1, 1]} : vector<2x4x256xf32> to vector<2x1x256xf32>
    %c1 = arith.constant 1 : index
    %c0_7 = arith.constant 0 : index
    %c0_8 = arith.constant 0 : index
    %13 = vector.load %arg1[%c1, %c0_7, %c0_8] : memref<4x8x1xf32, #tpu.memory_space<vmem>>, vector<1x8x1xf32>
    %14 = vector.shape_cast %13 : vector<1x8x1xf32> to vector<8x1xf32>
    %15 = vector.shape_cast %14 : vector<8x1xf32> to vector<1x8x1xf32>
    %16 = vector.broadcast %12 : vector<2x1x256xf32> to vector<2x8x256xf32>
    %17 = vector.broadcast %15 : vector<1x8x1xf32> to vector<2x8x256xf32>
    %18 = arith.mulf %16, %17 : vector<2x8x256xf32>
    %19 = arith.addf %11, %18 : vector<2x8x256xf32>
    %20 = vector.extract_strided_slice %0 {offsets = [0, 2, 0], sizes = [2, 1, 256], strides = [1, 1, 1]} : vector<2x4x256xf32> to vector<2x1x256xf32>
    %c2 = arith.constant 2 : index
    %c0_9 = arith.constant 0 : index
    %c0_10 = arith.constant 0 : index
    %21 = vector.load %arg1[%c2, %c0_9, %c0_10] : memref<4x8x1xf32, #tpu.memory_space<vmem>>, vector<1x8x1xf32>
    %22 = vector.shape_cast %21 : vector<1x8x1xf32> to vector<8x1xf32>
    %23 = vector.shape_cast %22 : vector<8x1xf32> to vector<1x8x1xf32>
    %24 = vector.broadcast %20 : vector<2x1x256xf32> to vector<2x8x256xf32>
    %25 = vector.broadcast %23 : vector<1x8x1xf32> to vector<2x8x256xf32>
    %26 = arith.mulf %24, %25 : vector<2x8x256xf32>
    %27 = arith.addf %19, %26 : vector<2x8x256xf32>
    %28 = vector.extract_strided_slice %0 {offsets = [0, 3, 0], sizes = [2, 1, 256], strides = [1, 1, 1]} : vector<2x4x256xf32> to vector<2x1x256xf32>
    %c3 = arith.constant 3 : index
    %c0_11 = arith.constant 0 : index
    %c0_12 = arith.constant 0 : index
    %29 = vector.load %arg1[%c3, %c0_11, %c0_12] : memref<4x8x1xf32, #tpu.memory_space<vmem>>, vector<1x8x1xf32>
    %30 = vector.shape_cast %29 : vector<1x8x1xf32> to vector<8x1xf32>
    %31 = vector.shape_cast %30 : vector<8x1xf32> to vector<1x8x1xf32>
    %32 = vector.broadcast %28 : vector<2x1x256xf32> to vector<2x8x256xf32>
    %33 = vector.broadcast %31 : vector<1x8x1xf32> to vector<2x8x256xf32>
    %34 = arith.mulf %32, %33 : vector<2x8x256xf32>
    %35 = arith.addf %27, %34 : vector<2x8x256xf32>
    %cst = arith.constant 0.000000e+00 : f32
    %36 = vector.broadcast %cst : f32 to vector<2x8x256xf32>
    %37 = arith.maximumf %35, %36 : vector<2x8x256xf32>
    %cst_13 = arith.constant dense<0.000000e+00> : vector<2x8xf32>
    %38 = vector.multi_reduction <add>, %37, %cst_13 [2] : vector<2x8x256xf32> to vector<2x8xf32>
    %cst_14 = arith.constant 2.560000e+02 : f32
    %39 = vector.broadcast %cst_14 : f32 to vector<2x8xf32>
    %40 = arith.divf %38, %39 : vector<2x8xf32>
    %c0_15 = arith.constant 0 : index
    %c0_16 = arith.constant 0 : index
    %41 = vector.load %arg9[%c0_15, %c0_16] : memref<2x8xf32, #tpu.memory_space<vmem>>, vector<2x8xf32>
    tpu.vector_store %arg9[%c0_15, %c0_16], %40 {strides = array<i32>} : memref<2x8xf32, #tpu.memory_space<vmem>>, vector<2x8xf32>,
    %c0_17 = arith.constant 0 : index
    %c0_18 = arith.constant 0 : index
    %42 = vector.load %arg3[%c0_17, %c0_18] : memref<32x8xf32, #tpu.memory_space<vmem>>, vector<32x8xf32>
    %c0_19 = arith.constant 0 : index
    %c0_20 = arith.constant 0 : index
    %43 = vector.load %arg4[%c0_19, %c0_20] : memref<32x1xf32, #tpu.memory_space<vmem>>, vector<32x1xf32>
    %44 = vector.extract_strided_slice %40 {offsets = [0, 0], sizes = [1, 8], strides = [1, 1]} : vector<2x8xf32> to vector<1x8xf32>
    %45 = vector.broadcast %44 : vector<1x8xf32> to vector<32x8xf32>
    %46 = arith.mulf %42, %45 : vector<32x8xf32>
    %cst_21 = arith.constant dense<0.000000e+00> : vector<32xf32>
    %47 = vector.multi_reduction <add>, %46, %cst_21 [1] : vector<32x8xf32> to vector<32xf32>
    %48 = vector.shape_cast %47 : vector<32xf32> to vector<32x1xf32>
    %49 = arith.addf %48, %43 : vector<32x1xf32>
    %50 = vector.extract_strided_slice %40 {offsets = [1, 0], sizes = [1, 8], strides = [1, 1]} : vector<2x8xf32> to vector<1x8xf32>
    %51 = vector.broadcast %50 : vector<1x8xf32> to vector<32x8xf32>
    %52 = arith.mulf %42, %51 : vector<32x8xf32>
    %cst_22 = arith.constant dense<0.000000e+00> : vector<32xf32>
    %53 = vector.multi_reduction <add>, %52, %cst_22 [1] : vector<32x8xf32> to vector<32xf32>
    %54 = vector.shape_cast %53 : vector<32xf32> to vector<32x1xf32>
    %55 = arith.addf %54, %43 : vector<32x1xf32>
    %56 = arith.addf %49, %55 : vector<32x1xf32>
    %cst_23 = arith.constant 5.000000e-01 : f32
    %57 = vector.broadcast %cst_23 : f32 to vector<32x1xf32>
    %58 = arith.mulf %56, %57 : vector<32x1xf32>
    %59 = arith.subf %49, %58 : vector<32x1xf32>
    %60 = arith.mulf %59, %59 : vector<32x1xf32>
    %61 = arith.subf %55, %58 : vector<32x1xf32>
    %62 = arith.mulf %61, %61 : vector<32x1xf32>
    %63 = arith.addf %60, %62 : vector<32x1xf32>
    %cst_24 = arith.constant 5.000000e-01 : f32
    %64 = vector.broadcast %cst_24 : f32 to vector<32x1xf32>
    %65 = arith.mulf %63, %64 : vector<32x1xf32>
    %cst_25 = arith.constant 9.99999974E-6 : f32
    %66 = vector.broadcast %cst_25 : f32 to vector<32x1xf32>
    %67 = arith.addf %65, %66 : vector<32x1xf32>
    %68 = math.rsqrt %67 : vector<32x1xf32>
    %c0_26 = arith.constant 0 : index
    %c0_27 = arith.constant 0 : index
    %69 = vector.load %arg5[%c0_26, %c0_27] : memref<32x1xf32, #tpu.memory_space<vmem>>, vector<32x1xf32>
    %70 = arith.mulf %68, %69 : vector<32x1xf32>
    %c0_28 = arith.constant 0 : index
    %c0_29 = arith.constant 0 : index
    %71 = vector.load %arg6[%c0_28, %c0_29] : memref<32x1xf32, #tpu.memory_space<vmem>>, vector<32x1xf32>
    %72 = arith.mulf %58, %70 : vector<32x1xf32>
    %73 = arith.subf %71, %72 : vector<32x1xf32>
    %c0_30 = arith.constant 0 : index
    %c0_31 = arith.constant 0 : index
    %74 = vector.load %arg7[%c0_30, %c0_31] : memref<32x16xf32, #tpu.memory_space<vmem>>, vector<32x16xf32>
    %c0_32 = arith.constant 0 : index
    %c0_33 = arith.constant 0 : index
    %75 = vector.load %arg8[%c0_32, %c0_33] : memref<1x16xf32, #tpu.memory_space<vmem>>, vector<1x16xf32>
    %76 = arith.mulf %49, %70 : vector<32x1xf32>
    %77 = arith.addf %76, %73 : vector<32x1xf32>
    %cst_34 = arith.constant 0.000000e+00 : f32
    %78 = vector.broadcast %cst_34 : f32 to vector<32x1xf32>
    %79 = arith.maximumf %77, %78 : vector<32x1xf32>
    %80 = vector.broadcast %79 : vector<32x1xf32> to vector<32x16xf32>
    %81 = arith.mulf %74, %80 : vector<32x16xf32>
    %cst_35 = arith.constant dense<0.000000e+00> : vector<16xf32>
    %82 = vector.multi_reduction <add>, %81, %cst_35 [0] : vector<32x16xf32> to vector<16xf32>
    %83 = vector.shape_cast %82 : vector<16xf32> to vector<1x16xf32>
    %84 = arith.addf %83, %75 : vector<1x16xf32>
    %85 = arith.mulf %55, %70 : vector<32x1xf32>
    %86 = arith.addf %85, %73 : vector<32x1xf32>
    %cst_36 = arith.constant 0.000000e+00 : f32
    %87 = vector.broadcast %cst_36 : f32 to vector<32x1xf32>
    %88 = arith.maximumf %86, %87 : vector<32x1xf32>
    %89 = vector.broadcast %88 : vector<32x1xf32> to vector<32x16xf32>
    %90 = arith.mulf %74, %89 : vector<32x16xf32>
    %cst_37 = arith.constant dense<0.000000e+00> : vector<16xf32>
    %91 = vector.multi_reduction <add>, %90, %cst_37 [0] : vector<32x16xf32> to vector<16xf32>
    %92 = vector.shape_cast %91 : vector<16xf32> to vector<1x16xf32>
    %93 = arith.addf %92, %75 : vector<1x16xf32>
    %94 = tpu.concatenate %84, %93 in 0 : vector<1x16xf32>, vector<1x16xf32> -> vector<2x16xf32>
    %c0_38 = arith.constant 0 : index
    %c0_39 = arith.constant 0 : index
    %95 = vector.load %arg10[%c0_38, %c0_39] : memref<2x16xf32, #tpu.memory_space<vmem>>, vector<2x16xf32>
    tpu.vector_store %arg10[%c0_38, %c0_39], %94 {strides = array<i32>} : memref<2x16xf32, #tpu.memory_space<vmem>>, vector<2x16xf32>,
    return
  }
}

</mosaic_0001>

<llo_original>
// kernel: tpu_custom_call.1
$region0: #{tpu_custom_call.1}
  #allocation0 [shape = 'u32[]', space=smem, size = 0x4, offset = 0x4, fixed_abs, tag = 'smem constant byte address 0x4 - core index']
  #allocation1 [shape = 'u32[144,128]{1,0:T(1,128)}', space=vmem, size = 0x12000, scoped, tag = 'internal scratch']
  %s0 = inlined_call_operand.vmem [shape: f32[2,4,256], index: 0, kind: input, shape index: {}]
  %s1 = inlined_call_operand.vmem [shape: f32[4,8,1], index: 1, kind: input, shape index: {}]
  %s2 = inlined_call_operand.vmem [shape: f32[8,1], index: 2, kind: input, shape index: {}]
  %s3 = inlined_call_operand.vmem [shape: f32[32,8], index: 3, kind: input, shape index: {}]
  %s4 = inlined_call_operand.vmem [shape: f32[32,1], index: 4, kind: input, shape index: {}]
  %s5 = inlined_call_operand.vmem [shape: f32[32,1], index: 5, kind: input, shape index: {}]
  %s6 = inlined_call_operand.vmem [shape: f32[32,1], index: 6, kind: input, shape index: {}]
  %s7 = inlined_call_operand.vmem [shape: f32[32,16], index: 7, kind: input, shape index: {}]
  %s8 = inlined_call_operand.vmem [shape: f32[1,16], index: 8, kind: input, shape index: {}]
  %s9 = inlined_call_operand.hbm [shape: f32[2,8], index: 9, kind: output, shape index: {0}]
  %s10 = inlined_call_operand.hbm [shape: f32[2,16], index: 10, kind: output, shape index: {1}]
  %11 = xla_tuple %s9, %s10
  %s12 = sld [smem:[#allocation0]]
  $region54: #{tpu_custom_call.1} parent=0
    _
  %s14 = ssub.s32 1, %s12
  %s15 = scalar_select 0, %s14, %s12
  $region1: #{tpu_custom_call.1} parent=0
    #allocation2 [shape = 'u8[1024]{0}', space=vmem, size = 0x400, scoped, tag = 'output window, operand 0, single buffered']
    #allocation3 [shape = 's32[1]{0}', space=sflag, size = 0x4, scoped, tag = 'scoped memory for tpu_custom_call.1']
    #allocation4 [shape = 'u8[1024]{0}', space=vmem, size = 0x400, scoped, tag = 'output window, operand 1, single buffered']
    #allocation5 [shape = 's32[1]{0}', space=sflag, size = 0x4, scoped, tag = 'scoped memory for tpu_custom_call.1']
    %16 = vsyncpa [#allocation3], 0
    %17 = vsyncpa [#allocation5], 0
    // Predicated region
    $region2: #{tpu_custom_call.1} parent=1 // pred_check
      _
    $region3: #{tpu_custom_call.1} parent=1 // pred_check_branch
      %19 = sbr.rel (0) target = $region5
    $region4: #{tpu_custom_call.1} parent=1 // pred_region
      _
    $region5: #{tpu_custom_call.1} parent=1 // pred_fallthru
      _
    // Predicated region
    $region6: #{tpu_custom_call.1} parent=1 // pred_check
      _
    $region7: #{tpu_custom_call.1} parent=1 // pred_check_branch
      %21 = sbr.rel (0) target = $region9
    $region8: #{tpu_custom_call.1} parent=1 // pred_region
      _
    $region9: #{tpu_custom_call.1} parent=1 // pred_fallthru
      _
    // Predicated region
    $region10: #{tpu_custom_call.1} parent=1 // pred_check
      _
    $region11: #{tpu_custom_call.1} parent=1 // pred_check_branch
      %23 = sbr.rel (0) target = $region13
    $region12: #{tpu_custom_call.1} parent=1 // pred_region
      _
    $region13: #{tpu_custom_call.1} parent=1 // pred_fallthru
      _
    // Predicated region
    $region14: #{tpu_custom_call.1} parent=1 // pred_check
      _
    $region15: #{tpu_custom_call.1} parent=1 // pred_check_branch
      %25 = sbr.rel (0) target = $region17
    $region16: #{tpu_custom_call.1} parent=1 // pred_region
      _
    $region17: #{tpu_custom_call.1} parent=1 // pred_fallthru
      _
    // Predicated region
    $region18: #{tpu_custom_call.1} parent=1 // pred_check
      _
    $region19: #{tpu_custom_call.1} parent=1 // pred_check_branch
      %27 = sbr.rel (0) target = $region21
    $region20: #{tpu_custom_call.1} parent=1 // pred_region
      _
    $region21: #{tpu_custom_call.1} parent=1 // pred_fallthru
      _
    // Predicated region
    $region22: #{tpu_custom_call.1} parent=1 // pred_check
      _
    $region23: #{tpu_custom_call.1} parent=1 // pred_check_branch
      %29 = sbr.rel (0) target = $region25
    $region24: #{tpu_custom_call.1} parent=1 // pred_region
      _
    $region25: #{tpu_custom_call.1} parent=1 // pred_fallthru
      _
    // Predicated region
    $region26: #{tpu_custom_call.1} parent=1 // pred_check
      _
    $region27: #{tpu_custom_call.1} parent=1 // pred_check_branch
      %31 = sbr.rel (0) target = $region29
    $region28: #{tpu_custom_call.1} parent=1 // pred_region
      _
    $region29: #{tpu_custom_call.1} parent=1 // pred_fallthru
      _
    // Predicated region
    $region30: #{tpu_custom_call.1} parent=1 // pred_check
      _
    $region31: #{tpu_custom_call.1} parent=1 // pred_check_branch
      %33 = sbr.rel (0) target = $region33
    $region32: #{tpu_custom_call.1} parent=1 // pred_region
      _
    $region33: #{tpu_custom_call.1} parent=1 // pred_fallthru
      _
    // Predicated region
    $region34: #{tpu_custom_call.1} parent=1 // pred_check
      _
    $region35: #{tpu_custom_call.1} parent=1 // pred_check_branch
      %35 = sbr.rel (0) target = $region37
    $region36: #{tpu_custom_call.1} parent=1 // pred_region
      _
    $region37: #{tpu_custom_call.1} parent=1 // pred_fallthru
      _
    %v36 = vld [vmem:[%s0] sm:$0xff]
    %v37 = vld [vmem:[%s0 + $0x8] sm:$0xff]
    %v38 = vld [vmem:[%s2] sm:$0xff]
    %v39 = vld [vmem:[%s1] sm:$0xff]
    %v42 = vlaneseq
    %v43 = vshrl.u32 %v42, 7
    %v44 = vsub.s32 0, %v43
    %v45 = vrot.slane %v36, %v44
    %v46 = vlaneseq
    %v47 = vshrl.u32 %v46, 7
    %v48 = vsub.s32 4, %v47
    %v49 = vrot.slane %v36, %v48
    %v50 = vlaneseq
    %v51 = vshrl.u32 %v50, 7
    %v52 = vsub.s32 0, %v51
    %v53 = vrot.slane %v37, %v52
    %v54 = vlaneseq
    %v55 = vshrl.u32 %v54, 7
    %v56 = vsub.s32 4, %v55
    %v57 = vrot.slane %v37, %v56
    %v62 = vlaneseq
    %v63 = vshrl.u32 %v62, 7
    %v64 = vsub.s32 0, %v63
    %v65 = vrot.slane %v45, %v64
    %v66 = vlaneseq
    %v67 = vshrl.u32 %v66, 7
    %v68 = vsub.s32 0, %v67
    %v69 = vrot.slane %v49, %v68
    %v70 = vlaneseq
    %v71 = vshrl.u32 %v70, 7
    %v72 = vsub.s32 0, %v71
    %v73 = vrot.slane %v53, %v72
    %v74 = vlaneseq
    %v75 = vshrl.u32 %v74, 7
    %v76 = vsub.s32 0, %v75
    %v77 = vrot.slane %v57, %v76
    %79 = vset.pattern.permute.xlu0 0
    %80 = vperm.xlu0 %79, %v39
    %v81 = vpop.permute.xlu0 %80
    %v83 = vmul.f32 %v65, %v81
    %v84 = vmul.f32 %v69, %v81
    %v85 = vmul.f32 %v73, %v81
    %v86 = vmul.f32 %v77, %v81
    %88 = vset.pattern.permute.xlu0 0
    %89 = vperm.xlu0 %88, %v38
    %v90 = vpop.permute.xlu0 %89
    %v92 = vadd.f32 %v90, %v83
    %v93 = vadd.f32 %v90, %v84
    %v94 = vadd.f32 %v90, %v85
    %v95 = vadd.f32 %v90, %v86
    %s96 = scalar_lea.vmem %s1, 8
    %v97 = vld [vmem:[%s96] sm:$0xff]
    %v98 = vlaneseq
    %v99 = vshrl.u32 %v98, 7
    %v100 = vsub.s32 1, %v99
    %v101 = vrot.slane %v36, %v100
    %v102 = vlaneseq
    %v103 = vshrl.u32 %v102, 7
    %v104 = vsub.s32 5, %v103
    %v105 = vrot.slane %v36, %v104
    %v106 = vlaneseq
    %v107 = vshrl.u32 %v106, 7
    %v108 = vsub.s32 1, %v107
    %v109 = vrot.slane %v37, %v108
    %v110 = vlaneseq
    %v111 = vshrl.u32 %v110, 7
    %v112 = vsub.s32 5, %v111
    %v113 = vrot.slane %v37, %v112
    %v118 = vlaneseq
    %v119 = vshrl.u32 %v118, 7
    %v120 = vsub.s32 1, %v119
    %v121 = vrot.slane %v101, %v120
    %v122 = vlaneseq
    %v123 = vshrl.u32 %v122, 7
    %v124 = vsub.s32 1, %v123
    %v125 = vrot.slane %v105, %v124
    %v126 = vlaneseq
    %v127 = vshrl.u32 %v126, 7
    %v128 = vsub.s32 1, %v127
    %v129 = vrot.slane %v109, %v128
    %v130 = vlaneseq
    %v131 = vshrl.u32 %v130, 7
    %v132 = vsub.s32 1, %v131
    %v133 = vrot.slane %v113, %v132
    %135 = vset.pattern.permute.xlu0 0
    %136 = vperm.xlu0 %135, %v97
    %v137 = vpop.permute.xlu0 %136
    %v139 = vmul.f32 %v121, %v137
    %v140 = vmul.f32 %v125, %v137
    %v141 = vmul.f32 %v129, %v137
    %v142 = vmul.f32 %v133, %v137
    %v143 = vadd.f32 %v92, %v139
    %v144 = vadd.f32 %v93, %v140
    %v145 = vadd.f32 %v94, %v141
    %v146 = vadd.f32 %v95, %v142
    %s147 = scalar_lea.vmem %s1, 16
    %v148 = vld [vmem:[%s147] sm:$0xff]
    %v149 = vlaneseq
    %v150 = vshrl.u32 %v149, 7
    %v151 = vsub.s32 2, %v150
    %v152 = vrot.slane %v36, %v151
    %v153 = vlaneseq
    %v154 = vshrl.u32 %v153, 7
    %v155 = vsub.s32 6, %v154
    %v156 = vrot.slane %v36, %v155
    %v157 = vlaneseq
    %v158 = vshrl.u32 %v157, 7
    %v159 = vsub.s32 2, %v158
    %v160 = vrot.slane %v37, %v159
    %v161 = vlaneseq
    %v162 = vshrl.u32 %v161, 7
    %v163 = vsub.s32 6, %v162
    %v164 = vrot.slane %v37, %v163
    %v169 = vlaneseq
    %v170 = vshrl.u32 %v169, 7
    %v171 = vsub.s32 2, %v170
    %v172 = vrot.slane %v152, %v171
    %v173 = vlaneseq
    %v174 = vshrl.u32 %v173, 7
    %v175 = vsub.s32 2, %v174
    %v176 = vrot.slane %v156, %v175
    %v177 = vlaneseq
    %v178 = vshrl.u32 %v177, 7
    %v179 = vsub.s32 2, %v178
    %v180 = vrot.slane %v160, %v179
    %v181 = vlaneseq
    %v182 = vshrl.u32 %v181, 7
    %v183 = vsub.s32 2, %v182
    %v184 = vrot.slane %v164, %v183
    %186 = vset.pattern.permute.xlu0 0
    %187 = vperm.xlu0 %186, %v148
    %v188 = vpop.permute.xlu0 %187
    %v190 = vmul.f32 %v172, %v188
    %v191 = vmul.f32 %v176, %v188
    %v192 = vmul.f32 %v180, %v188
    %v193 = vmul.f32 %v184, %v188
    %v194 = vadd.f32 %v143, %v190
    %v195 = vadd.f32 %v144, %v191
    %v196 = vadd.f32 %v145, %v192
    %v197 = vadd.f32 %v146, %v193
    %s198 = scalar_lea.vmem %s1, 24
    %v199 = vld [vmem:[%s198] sm:$0xff]
    %v200 = vlaneseq
    %v201 = vshrl.u32 %v200, 7
    %v202 = vsub.s32 3, %v201
    %v203 = vrot.slane %v36, %v202
    %v204 = vlaneseq
    %v205 = vshrl.u32 %v204, 7
    %v206 = vsub.s32 7, %v205
    %v207 = vrot.slane %v36, %v206
    %v208 = vlaneseq
    %v209 = vshrl.u32 %v208, 7
    %v210 = vsub.s32 3, %v209
    %v211 = vrot.slane %v37, %v210
    %v212 = vlaneseq
    %v213 = vshrl.u32 %v212, 7
    %v214 = vsub.s32 7, %v213
    %v215 = vrot.slane %v37, %v214
    %v220 = vlaneseq
    %v221 = vshrl.u32 %v220, 7
    %v222 = vsub.s32 3, %v221
    %v223 = vrot.slane %v203, %v222
    %v224 = vlaneseq
    %v225 = vshrl.u32 %v224, 7
    %v226 = vsub.s32 3, %v225
    %v227 = vrot.slane %v207, %v226
    %v228 = vlaneseq
    %v229 = vshrl.u32 %v228, 7
    %v230 = vsub.s32 3, %v229
    %v231 = vrot.slane %v211, %v230
    %v232 = vlaneseq
    %v233 = vshrl.u32 %v232, 7
    %v234 = vsub.s32 3, %v233
    %v235 = vrot.slane %v215, %v234
    %237 = vset.pattern.permute.xlu0 0
    %238 = vperm.xlu0 %237, %v199
    %v239 = vpop.permute.xlu0 %238
    %v241 = vmul.f32 %v223, %v239
    %v242 = vmul.f32 %v227, %v239
    %v243 = vmul.f32 %v231, %v239
    %v244 = vmul.f32 %v235, %v239
    %v245 = vadd.f32 %v194, %v241
    %v246 = vadd.f32 %v195, %v242
    %v247 = vadd.f32 %v196, %v243
    %v248 = vadd.f32 %v197, %v244
    %v249 = vmax.f32 %v245, 0.0
    %v250 = vmax.f32 %v246, 0.0
    %v251 = vmax.f32 %v247, 0.0
    %v252 = vmax.f32 %v248, 0.0
    %v253 = vadd.f32 %v249, %v250
    %254 = vadd.xlane.f32.xlu0 %v253
    %v255 = vpop.xlane.xlu0 %254
    %v256 = vadd.f32 %v251, %v252
    %257 = vadd.xlane.f32.xlu0 %v256
    %v258 = vpop.xlane.xlu0 %257
    %v259 = vrcp.pop 256.0
    %v260 = vmul.f32 %v255, %v259
    %v261 = vmul.f32 %v258, %v259
    %v264 = vlaneseq
    %v265 = vand.u32 %v264, 127
    %v266 = vlaneseq
    %v267 = vshrl.u32 %v266, 7
    %v268 = vsub.s32 %v265, %v267
    %v269 = vrot.slane %v260, %v268
    %v270 = vlaneseq
    %v271 = vshrl.u32 %v270, 7
    %v272 = vsub.s32 %v265, %v271
    %v273 = vrot.slane %v261, %v272
    %vm274 = vcmask 1041409
    %v275 = vsel %vm274, %v273, %v269
    %vm277 = vcmask 58368
    %278 = vst.msk [vmem:[#allocation2] sm:$0x3] %vm277, %v275
    %v279 = vld [vmem:[%s3] sm:$0xff]
    %v280 = vld [vmem:[%s3 + $0x8] sm:$0xff]
    %v281 = vld [vmem:[%s3 + $0x10] sm:$0xff]
    %v282 = vld [vmem:[%s3 + $0x18] sm:$0xff]
    %v283 = vld [vmem:[%s4] sm:$0xff]
    %v284 = vld [vmem:[%s4 + $0x8] sm:$0xff]
    %v285 = vld [vmem:[%s4 + $0x10] sm:$0xff]
    %v286 = vld [vmem:[%s4 + $0x18] sm:$0xff]
    %vm287 = vcmask 1042434
    %v288 = vsel %vm287, %v269, %v269
    %vm289 = vcmask 1043459
    %v290 = vsel %vm289, %v269, %v288
    %vm291 = vcmask 1044484
    %v292 = vsel %vm291, %v269, %v290
    %vm293 = vcmask 1045509
    %v294 = vsel %vm293, %v269, %v292
    %vm295 = vcmask 1046534
    %v296 = vsel %vm295, %v269, %v294
    %vm297 = vcmask 1047559
    %v298 = vsel %vm297, %v269, %v296
    %v300 = vmul.f32 %v279, %v298
    %v301 = vmul.f32 %v280, %v298
    %v302 = vmul.f32 %v281, %v298
    %v303 = vmul.f32 %v282, %v298
    %vm304 = vcmask 64512
    %v305 = vsel %vm304, %v300, 0.0
    %306 = vadd.xlane.f32.xlu0 %v305
    %v307 = vpop.xlane.xlu0 %306
    %v308 = vsel %vm304, %v301, 0.0
    %309 = vadd.xlane.f32.xlu0 %v308
    %v310 = vpop.xlane.xlu0 %309
    %v311 = vsel %vm304, %v302, 0.0
    %312 = vadd.xlane.f32.xlu0 %v311
    %v313 = vpop.xlane.xlu0 %312
    %v314 = vsel %vm304, %v303, 0.0
    %315 = vadd.xlane.f32.xlu0 %v314
    %v316 = vpop.xlane.xlu0 %315
    %v317 = vadd.f32 %v307, %v283
    %v318 = vadd.f32 %v310, %v284
    %v319 = vadd.f32 %v313, %v285
    %v320 = vadd.f32 %v316, %v286
    %v321 = vsel %vm287, %v273, %v273
    %v322 = vsel %vm289, %v273, %v321
    %v323 = vsel %vm291, %v273, %v322
    %v324 = vsel %vm293, %v273, %v323
    %v325 = vsel %vm295, %v273, %v324
    %v326 = vsel %vm297, %v273, %v325
    %v328 = vmul.f32 %v279, %v326
    %v329 = vmul.f32 %v280, %v326
    %v330 = vmul.f32 %v281, %v326
    %v331 = vmul.f32 %v282, %v326
    %v332 = vsel %vm304, %v328, 0.0
    %333 = vadd.xlane.f32.xlu0 %v332
    %v334 = vpop.xlane.xlu0 %333
    %v335 = vsel %vm304, %v329, 0.0
    %336 = vadd.xlane.f32.xlu0 %v335
    %v337 = vpop.xlane.xlu0 %336
    %v338 = vsel %vm304, %v330, 0.0
    %339 = vadd.xlane.f32.xlu0 %v338
    %v340 = vpop.xlane.xlu0 %339
    %v341 = vsel %vm304, %v331, 0.0
    %342 = vadd.xlane.f32.xlu0 %v341
    %v343 = vpop.xlane.xlu0 %342
    %v344 = vadd.f32 %v334, %v283
    %v345 = vadd.f32 %v337, %v284
    %v346 = vadd.f32 %v340, %v285
    %v347 = vadd.f32 %v343, %v286
    %v348 = vadd.f32 %v317, %v344
    %v349 = vadd.f32 %v318, %v345
    %v350 = vadd.f32 %v319, %v346
    %v351 = vadd.f32 %v320, %v347
    %v352 = vmul.f32 %v348, 0.5
    %v353 = vmul.f32 %v349, 0.5
    %v354 = vmul.f32 %v350, 0.5
    %v355 = vmul.f32 %v351, 0.5
    %v356 = vsub.f32 %v317, %v352
    %v357 = vsub.f32 %v318, %v353
    %v358 = vsub.f32 %v319, %v354
    %v359 = vsub.f32 %v320, %v355
    %v360 = vmul.f32 %v356, %v356
    %v361 = vmul.f32 %v357, %v357
    %v362 = vmul.f32 %v358, %v358
    %v363 = vmul.f32 %v359, %v359
    %v364 = vsub.f32 %v344, %v352
    %v365 = vsub.f32 %v345, %v353
    %v366 = vsub.f32 %v346, %v354
    %v367 = vsub.f32 %v347, %v355
    %v368 = vmul.f32 %v364, %v364
    %v369 = vmul.f32 %v365, %v365
    %v370 = vmul.f32 %v366, %v366
    %v371 = vmul.f32 %v367, %v367
    %v372 = vadd.f32 %v360, %v368
    %v373 = vadd.f32 %v361, %v369
    %v374 = vadd.f32 %v362, %v370
    %v375 = vadd.f32 %v363, %v371
    %v376 = vmul.f32 %v372, 0.5
    %v377 = vmul.f32 %v373, 0.5
    %v378 = vmul.f32 %v374, 0.5
    %v379 = vmul.f32 %v375, 0.5
    %v380 = vadd.f32 %v376, 1e-05
    %v381 = vadd.f32 %v377, 1e-05
    %v382 = vadd.f32 %v378, 1e-05
    %v383 = vadd.f32 %v379, 1e-05
    %v384 = vrsqrt.pop %v380
    %v385 = vrsqrt.pop %v381
    %v386 = vrsqrt.pop %v382
    %v387 = vrsqrt.pop %v383
    %v388 = vld [vmem:[%s5] sm:$0xff]
    %v389 = vld [vmem:[%s5 + $0x8] sm:$0xff]
    %v390 = vld [vmem:[%s5 + $0x10] sm:$0xff]
    %v391 = vld [vmem:[%s5 + $0x18] sm:$0xff]
    %v392 = vmul.f32 %v384, %v388
    %v393 = vmul.f32 %v385, %v389
    %v394 = vmul.f32 %v386, %v390
    %v395 = vmul.f32 %v387, %v391
    %v396 = vld [vmem:[%s6] sm:$0xff]
    %v397 = vld [vmem:[%s6 + $0x8] sm:$0xff]
    %v398 = vld [vmem:[%s6 + $0x10] sm:$0xff]
    %v399 = vld [vmem:[%s6 + $0x18] sm:$0xff]
    %v400 = vmul.f32 %v352, %v392
    %v401 = vmul.f32 %v353, %v393
    %v402 = vmul.f32 %v354, %v394
    %v403 = vmul.f32 %v355, %v395
    %v404 = vsub.f32 %v396, %v400
    %v405 = vsub.f32 %v397, %v401
    %v406 = vsub.f32 %v398, %v402
    %v407 = vsub.f32 %v399, %v403
    %v408 = vld [vmem:[%s7] sm:$0xff]
    %v409 = vld [vmem:[%s7 + $0x8] sm:$0xff]
    %v410 = vld [vmem:[%s7 + $0x10] sm:$0xff]
    %v411 = vld [vmem:[%s7 + $0x18] sm:$0xff]
    %v412 = vld [vmem:[%s8] sm:$0x1]
    %v413 = vmul.f32 %v317, %v392
    %v414 = vmul.f32 %v318, %v393
    %v415 = vmul.f32 %v319, %v394
    %v416 = vmul.f32 %v320, %v395
    %v417 = vadd.f32 %v413, %v404
    %v418 = vadd.f32 %v414, %v405
    %v419 = vadd.f32 %v415, %v406
    %v420 = vadd.f32 %v416, %v407
    %v421 = vmax.f32 %v417, 0.0
    %v422 = vmax.f32 %v418, 0.0
    %v423 = vmax.f32 %v419, 0.0
    %v424 = vmax.f32 %v420, 0.0
    %426 = vset.pattern.permute.xlu0 0
    %427 = vperm.xlu0 %426, %v421
    %v428 = vpop.permute.xlu0 %427
    %431 = vset.pattern.permute.xlu0 0
    %432 = vperm.xlu0 %431, %v422
    %v433 = vpop.permute.xlu0 %432
    %436 = vset.pattern.permute.xlu0 0
    %437 = vperm.xlu0 %436, %v423
    %v438 = vpop.permute.xlu0 %437
    %441 = vset.pattern.permute.xlu0 0
    %442 = vperm.xlu0 %441, %v424
    %v443 = vpop.permute.xlu0 %442
    %v445 = vmul.f32 %v408, %v428
    %v446 = vmul.f32 %v409, %v433
    %v447 = vmul.f32 %v410, %v438
    %v448 = vmul.f32 %v411, %v443
    %vm449 = vcmask 130048
    %v450 = vsel %vm449, %v445, 0.0
    %v451 = vsel %vm449, %v446, 0.0
    %v452 = vadd.f32 %v450, %v451
    %v453 = vsel %vm449, %v447, 0.0
    %v454 = vadd.f32 %v452, %v453
    %v455 = vsel %vm449, %v448, 0.0
    %v456 = vadd.f32 %v454, %v455
    %v457 = vrot.slane %v456, 4
    %v458 = vadd.f32 %v456, %v457
    %v459 = vrot.slane %v458, 2
    %v460 = vadd.f32 %v458, %v459
    %v461 = vrot.slane %v460, 1
    %v462 = vadd.f32 %v460, %v461
    %v463 = vadd.f32 %v462, %v412
    %v464 = vmul.f32 %v344, %v392
    %v465 = vmul.f32 %v345, %v393
    %v466 = vmul.f32 %v346, %v394
    %v467 = vmul.f32 %v347, %v395
    %v468 = vadd.f32 %v464, %v404
    %v469 = vadd.f32 %v465, %v405
    %v470 = vadd.f32 %v466, %v406
    %v471 = vadd.f32 %v467, %v407
    %v472 = vmax.f32 %v468, 0.0
    %v473 = vmax.f32 %v469, 0.0
    %v474 = vmax.f32 %v470, 0.0
    %v475 = vmax.f32 %v471, 0.0
    %477 = vset.pattern.permute.xlu0 0
    %478 = vperm.xlu0 %477, %v472
    %v479 = vpop.permute.xlu0 %478
    %482 = vset.pattern.permute.xlu0 0
    %483 = vperm.xlu0 %482, %v473
    %v484 = vpop.permute.xlu0 %483
    %487 = vset.pattern.permute.xlu0 0
    %488 = vperm.xlu0 %487, %v474
    %v489 = vpop.permute.xlu0 %488
    %492 = vset.pattern.permute.xlu0 0
    %493 = vperm.xlu0 %492, %v475
    %v494 = vpop.permute.xlu0 %493
    %v496 = vmul.f32 %v408, %v479
    %v497 = vmul.f32 %v409, %v484
    %v498 = vmul.f32 %v410, %v489
    %v499 = vmul.f32 %v411, %v494
    %v500 = vsel %vm449, %v496, 0.0
    %v501 = vsel %vm449, %v497, 0.0
    %v502 = vadd.f32 %v500, %v501
    %v503 = vsel %vm449, %v498, 0.0
    %v504 = vadd.f32 %v502, %v503
    %v505 = vsel %vm449, %v499, 0.0
    %v506 = vadd.f32 %v504, %v505
    %v507 = vrot.slane %v506, 4
    %v508 = vadd.f32 %v506, %v507
    %v509 = vrot.slane %v508, 2
    %v510 = vadd.f32 %v508, %v509
    %v511 = vrot.slane %v510, 1
    %v512 = vadd.f32 %v510, %v511
    %v513 = vadd.f32 %v512, %v412
    %v515 = vrot.slane %v513, 7
    %vm517 = vcmask 1040384
    %v518 = vsel %vm517, %v463, %v515
    %vm519 = vcmask 123904
    %520 = vst.msk [vmem:[#allocation4] sm:$0x3] %vm519, %v518
    // Predicated region
    $region38: #{tpu_custom_call.1} parent=1 // pred_check
      _
    $region39: #{tpu_custom_call.1} parent=1 // pred_check_branch
      %522 = sbr.rel (0) target = $region41
    $region40: #{tpu_custom_call.1} parent=1 // pred_region
      %s524 = ssub.s32 32, 32
      %525 = vsyncadd [#allocation3], %s524
      %s527 = sshll.u32 [#allocation2], 4
      %s528 = int_to_ptr.vmem [resolvable:$true] %s527
      %530 = dma.vmem_to_hbm [thread:$0]  %s528, 32, %s9, [#allocation3]
    $region41: #{tpu_custom_call.1} parent=1 // pred_fallthru
      _
    // Predicated region
    $region42: #{tpu_custom_call.1} parent=1 // pred_check
      _
    $region43: #{tpu_custom_call.1} parent=1 // pred_check_branch
      %532 = sbr.rel (0) target = $region45
    $region44: #{tpu_custom_call.1} parent=1 // pred_region
      %s534 = ssub.s32 32, 32
      %535 = vsyncadd [#allocation5], %s534
      %s537 = sshll.u32 [#allocation4], 4
      %s538 = int_to_ptr.vmem [resolvable:$true] %s537
      %540 = dma.vmem_to_hbm [thread:$0]  %s538, 32, %s10, [#allocation5]
    $region45: #{tpu_custom_call.1} parent=1 // pred_fallthru
      _
    // Predicated region
    $region46: #{tpu_custom_call.1} parent=1 // pred_check
      _
    $region47: #{tpu_custom_call.1} parent=1 // pred_check_branch
      %542 = sbr.rel (0) target = $region49
    $region48: #{tpu_custom_call.1} parent=1 // pred_region
      %543 = dma.done [#allocation3], 32
    $region49: #{tpu_custom_call.1} parent=1 // pred_fallthru
      _
    // Predicated region
    $region50: #{tpu_custom_call.1} parent=1 // pred_check
      _
    $region51: #{tpu_custom_call.1} parent=1 // pred_check_branch
      %545 = sbr.rel (0) target = $region53
    $region52: #{tpu_custom_call.1} parent=1 // pred_region
      %546 = dma.done [#allocation5], 32
    $region53: #{tpu_custom_call.1} parent=1 // pred_fallthru
      _
    %547 = vsyncpa [#allocation3], 1
    %548 = vsyncpa [#allocation5], 1

</llo_original>
